<compile_context>
chip_gen: v7x
topology: tpu7x:2x2x1
jax: 0.10.0
libtpu: 0.0.40
codegen_flags: <defaults>
</compile_context>

<pallas_src>
import jax
import jax.numpy as jnp
import numpy as np
from jax.experimental import pallas as pl
from jax.experimental.pallas import tpu as pltpu


def _round_up(a, m):
    return (a + m - 1) // m * m


def _final_layer_kernel(x_ref, shift_ref, scale1_ref, w_ref, b_ref, o_ref):
    # x_ref:      (1, TILE_T, H)   current (batch, T-tile) of tokens
    # shift_ref:  (1, 1, H)        per-batch adaLN shift        (fp32)
    # scale1_ref: (1, 1, H)        per-batch 1 + adaLN scale    (fp32)
    # w_ref:      (H, O_pad)       final linear weight, transposed + lane-padded
    # b_ref:      (1, O_pad)       final linear bias, lane-padded (fp32)
    # o_ref:      (1, TILE_T, O_pad)
    x = x_ref[0].astype(jnp.float32)                                  # (TILE_T, H)

    # LayerNorm over hidden dim, eps=1e-6, no elementwise affine (fp32 stats).
    mean = jnp.mean(x, axis=-1, keepdims=True)                        # (TILE_T, 1)
    var = jnp.mean(jnp.square(x - mean), axis=-1, keepdims=True)      # (TILE_T, 1)
    x_norm = (x - mean) * jax.lax.rsqrt(var + 1e-6)                   # (TILE_T, H)

    # modulate: x * (1 + scale) + shift, broadcast over tokens (one FMA).
    x_mod = x_norm * scale1_ref[0] + shift_ref[0]                     # (TILE_T, H)

    # Final projection H -> O_pad; cast to weight dtype only at the MXU
    # boundary, accumulate in fp32, add bias in fp32.
    out = jnp.dot(x_mod.astype(w_ref.dtype), w_ref[...],
                  preferred_element_type=jnp.float32)                 # (TILE_T, O_pad)
    out = out + b_ref[...]

    o_ref[0] = out.astype(o_ref.dtype)


def prepare_final_layer_params(w_ada, b_ada, w_lin, b_lin, param_dtype=None):
    """One-time parameter preprocessing: transpose + lane-pad the projection.

    w_ada: (2H, H)  adaLN_modulation[1].weight     b_ada: (2H,)
    w_lin: (O, H)   linear.weight (O = p*p*C)      b_lin: (O,)
    """
    O, H = w_lin.shape
    O_pad = _round_up(O, 128)
    if param_dtype is None:
        param_dtype = jnp.asarray(w_lin).dtype

    w_lin_t = jnp.zeros((H, O_pad), param_dtype)
    w_lin_t = w_lin_t.at[:, :O].set(jnp.asarray(w_lin, param_dtype).T)
    b_lin_p = jnp.zeros((1, O_pad), jnp.float32)
    b_lin_p = b_lin_p.at[0, :O].set(jnp.asarray(b_lin, jnp.float32))

    return {
        "w_ada_t": jnp.asarray(w_ada).T,          # (H, 2H) — used in plain JAX
        "b_ada": jnp.asarray(b_ada),              # (2H,)
        "w_lin_t": w_lin_t,                       # (H, O_pad)
        "b_lin": b_lin_p,                         # (1, O_pad)
        "out_dim": O,
    }


def _vmem_limit_bytes(tile_t, H, O_pad, x_itemsize, w_itemsize):
    x_buf = 2 * tile_t * H * x_itemsize               # double-buffered x tiles
    o_buf = 2 * tile_t * O_pad * x_itemsize           # double-buffered out tiles
    w_res = 2 * H * O_pad * w_itemsize                # resident projection weight
    small = 4 * (2 * H + O_pad) * 4                   # shift / scale1 / bias
    scratch = 4 * tile_t * (H + O_pad) * 4            # fp32 intermediates headroom
    total = x_buf + o_buf + w_res + small + scratch + (4 << 20)
    # Floor at ~16 MiB, cap well under v7x's 64 MiB physical VMEM.
    return int(min(max(total, 16 << 20), 48 << 20))


def final_layer_forward(x, c, params, tile_t=256):
    """Pallas implementation of FinalLayer.forward.

    x: (B, T, H)    c: (B, H)    params: from prepare_final_layer_params
    returns (B, T, O)
    """
    B, T, H = x.shape
    O = params["out_dim"]
    w_lin_t = params["w_lin_t"]
    b_lin = params["b_lin"]
    O_pad = w_lin_t.shape[1]

    # adaLN modulation hoisted out of the kernel (M=1 matvec; not MXU work).
    c32 = c.astype(jnp.float32)
    c_silu = c32 * jax.nn.sigmoid(c32)
    ada = c_silu @ params["w_ada_t"].astype(jnp.float32) \
        + params["b_ada"].astype(jnp.float32)                         # (B, 2H)
    shift = ada[:, :H].reshape(B, 1, H)
    scale1 = (ada[:, H:] + 1.0).reshape(B, 1, H)                      # 1 + scale

    # Tile the sequence dimension (multiple of 8 sublanes), pad T if needed.
    tile_t = max(8, min(_round_up(tile_t, 8), _round_up(T, 8)))
    T_pad = _round_up(T, tile_t)
    x_in = x if T_pad == T else jnp.pad(x, ((0, 0), (0, T_pad - T), (0, 0)))
    n_t = T_pad // tile_t

    vmem_bytes = _vmem_limit_bytes(tile_t, H, O_pad,
                                   x.dtype.itemsize, w_lin_t.dtype.itemsize)

    out = pl.pallas_call(
        _final_layer_kernel,
        out_shape=jax.ShapeDtypeStruct((B, T_pad, O_pad), x.dtype),
        grid=(B, n_t),
        in_specs=[
            pl.BlockSpec((1, tile_t, H), lambda b, t: (b, t, 0)),     # x tile
            pl.BlockSpec((1, 1, H), lambda b, t: (b, 0, 0)),          # shift
            pl.BlockSpec((1, 1, H), lambda b, t: (b, 0, 0)),          # 1 + scale
            pl.BlockSpec((H, O_pad), lambda b, t: (0, 0)),            # W_lin^T (padded)
            pl.BlockSpec((1, O_pad), lambda b, t: (0, 0)),            # bias (padded)
        ],
        out_specs=pl.BlockSpec((1, tile_t, O_pad), lambda b, t: (b, t, 0)),
        compiler_params=pltpu.CompilerParams(
            dimension_semantics=("parallel", "parallel"),
            vmem_limit_bytes=vmem_bytes),
    )(x_in, shift, scale1, w_lin_t, b_lin)

    return out[:, :T, :O]


def _reference_forward(x, c, w_ada, b_ada, w_lin, b_lin):
    """Pure-JAX reference matching the PyTorch module."""
    H = x.shape[-1]
    c_silu = c * jax.nn.sigmoid(c)
    ada = c_silu @ w_ada.T + b_ada
    shift, scale = ada[:, :H], ada[:, H:]
    mean = jnp.mean(x, axis=-1, keepdims=True)
    var = jnp.mean(jnp.square(x - mean), axis=-1, keepdims=True)
    x_norm = (x - mean) / jnp.sqrt(var + 1e-6)
    x_mod = x_norm * (1 + scale[:, None, :]) + shift[:, None, :]
    return x_mod @ w_lin.T + b_lin


if __name__ == "__main__":
    # Small shapes implied by the module: hidden_size=32, patch_size=2,
    # out_channels=4 -> out_dim = 16. Batch=2, seq=8 tokens.
    B, T, H = 2, 8, 32
    patch_size, out_channels = 2, 4
    O = patch_size * patch_size * out_channels

    key = jax.random.PRNGKey(0)
    kx, kc, kwa, kba, kwl, kbl = jax.random.split(key, 6)

    x = jax.random.normal(kx, (B, T, H), dtype=jnp.float32)
    c = jax.random.normal(kc, (B, H), dtype=jnp.float32)

    w_ada = jax.random.normal(kwa, (2 * H, H), dtype=jnp.float32) / np.sqrt(H)
    b_ada = jax.random.normal(kba, (2 * H,), dtype=jnp.float32) * 0.01
    w_lin = jax.random.normal(kwl, (O, H), dtype=jnp.float32) / np.sqrt(H)
    b_lin = jax.random.normal(kbl, (O,), dtype=jnp.float32) * 0.01

    # One-time parameter prep (transpose / pad), then forward through the kernel.
    params = prepare_final_layer_params(w_ada, b_ada, w_lin, b_lin)
    out = final_layer_forward(x, c, params)
    out = jax.block_until_ready(out)

    ref = _reference_forward(x, c, w_ada, b_ada, w_lin, b_lin)
    np.testing.assert_allclose(np.asarray(out), np.asarray(ref),
                               rtol=1e-5, atol=1e-5)

    print("KERNEL_OK")
</pallas_src>

<mosaic_0001>
module attributes {stable_mosaic.version = 11 : i64} {
  func.func @_final_layer_kernel(%arg0: i32, %arg1: i32, %arg2: memref<1x8x32xf32, #tpu.memory_space<vmem>>, %arg3: memref<1x1x32xf32, #tpu.memory_space<vmem>>, %arg4: memref<1x1x32xf32, #tpu.memory_space<vmem>>, %arg5: memref<32x128xf32, #tpu.memory_space<vmem>>, %arg6: memref<1x128xf32, #tpu.memory_space<vmem>>, %arg7: memref<1x8x128xf32, #tpu.memory_space<vmem>>) attributes {dimension_semantics = [#tpu.dimension_semantics<parallel>, #tpu.dimension_semantics<parallel>], iteration_bounds = array<i64: 2, 1>, scalar_prefetch = 0 : i64, scratch_operands = 0 : i64, tpu.core_type = #tpu.core_type<tc>, window_params = [{transform_indices = @transform_0, window_bounds = array<i64: 1, 8, 32>}, {transform_indices = @transform_1, window_bounds = array<i64: 1, 1, 32>}, {transform_indices = @transform_2, window_bounds = array<i64: 1, 1, 32>}, {pipeline_mode = #tpu.pipeline_mode<synchronous>, transform_indices = @transform_3, window_bounds = array<i64: 32, 128>}, {pipeline_mode = #tpu.pipeline_mode<synchronous>, transform_indices = @transform_4, window_bounds = array<i64: 1, 128>}, {transform_indices = @transform_5, window_bounds = array<i64: 1, 8, 128>}]} {
    %c0 = arith.constant 0 : index
    %c0_0 = arith.constant 0 : index
    %c0_1 = arith.constant 0 : index
    %0 = vector.load %arg2[%c0, %c0_0, %c0_1] : memref<1x8x32xf32, #tpu.memory_space<vmem>>, vector<1x8x32xf32>
    %1 = vector.shape_cast %0 : vector<1x8x32xf32> to vector<8x32xf32>
    %cst = arith.constant dense<0.000000e+00> : vector<8xf32>
    %2 = vector.multi_reduction <add>, %1, %cst [1] : vector<8x32xf32> to vector<8xf32>
    %3 = vector.shape_cast %2 : vector<8xf32> to vector<8x1xf32>
    %cst_2 = arith.constant 3.200000e+01 : f32
    %4 = vector.broadcast %cst_2 : f32 to vector<8x1xf32>
    %5 = arith.divf %3, %4 : vector<8x1xf32>
    %6 = vector.broadcast %5 : vector<8x1xf32> to vector<8x32xf32>
    %7 = arith.subf %1, %6 : vector<8x32xf32>
    %8 = arith.mulf %7, %7 : vector<8x32xf32>
    %cst_3 = arith.constant dense<0.000000e+00> : vector<8xf32>
    %9 = vector.multi_reduction <add>, %8, %cst_3 [1] : vector<8x32xf32> to vector<8xf32>
    %10 = vector.shape_cast %9 : vector<8xf32> to vector<8x1xf32>
    %cst_4 = arith.constant 3.200000e+01 : f32
    %11 = vector.broadcast %cst_4 : f32 to vector<8x1xf32>
    %12 = arith.divf %10, %11 : vector<8x1xf32>
    %13 = vector.broadcast %5 : vector<8x1xf32> to vector<8x32xf32>
    %14 = arith.subf %1, %13 : vector<8x32xf32>
    %cst_5 = arith.constant 9.99999997E-7 : f32
    %15 = vector.broadcast %cst_5 : f32 to vector<8x1xf32>
    %16 = arith.addf %12, %15 : vector<8x1xf32>
    %17 = math.rsqrt %16 : vector<8x1xf32>
    %18 = vector.broadcast %17 : vector<8x1xf32> to vector<8x32xf32>
    %19 = arith.mulf %14, %18 : vector<8x32xf32>
    %c0_6 = arith.constant 0 : index
    %c0_7 = arith.constant 0 : index
    %c0_8 = arith.constant 0 : index
    %20 = vector.load %arg4[%c0_6, %c0_7, %c0_8] : memref<1x1x32xf32, #tpu.memory_space<vmem>>, vector<1x1x32xf32>
    %21 = vector.shape_cast %20 : vector<1x1x32xf32> to vector<1x32xf32>
    %22 = vector.broadcast %21 : vector<1x32xf32> to vector<8x32xf32>
    %23 = arith.mulf %19, %22 : vector<8x32xf32>
    %c0_9 = arith.constant 0 : index
    %c0_10 = arith.constant 0 : index
    %c0_11 = arith.constant 0 : index
    %24 = vector.load %arg3[%c0_9, %c0_10, %c0_11] : memref<1x1x32xf32, #tpu.memory_space<vmem>>, vector<1x1x32xf32>
    %25 = vector.shape_cast %24 : vector<1x1x32xf32> to vector<1x32xf32>
    %26 = vector.broadcast %25 : vector<1x32xf32> to vector<8x32xf32>
    %27 = arith.addf %23, %26 : vector<8x32xf32>
    %c0_12 = arith.constant 0 : index
    %c0_13 = arith.constant 0 : index
    %28 = vector.load %arg5[%c0_12, %c0_13] : memref<32x128xf32, #tpu.memory_space<vmem>>, vector<32x128xf32>
    %cst_14 = arith.constant dense<0.000000e+00> : vector<8x128xf32>
    %29 = tpu.matmul %27, %28, %cst_14 {dimension_numbers = #tpu.dot_dimension_numbers<[1], [0], [0], [1], [0, 0, 1, 1], [], []>} : vector<8x32xf32>, vector<32x128xf32>, vector<8x128xf32> -> vector<8x128xf32>
    %c0_15 = arith.constant 0 : index
    %c0_16 = arith.constant 0 : index
    %30 = vector.load %arg6[%c0_15, %c0_16] : memref<1x128xf32, #tpu.memory_space<vmem>>, vector<1x128xf32>
    %31 = vector.broadcast %30 : vector<1x128xf32> to vector<8x128xf32>
    %32 = arith.addf %29, %31 : vector<8x128xf32>
    %c0_17 = arith.constant 0 : index
    %c0_18 = arith.constant 0 : index
    %c0_19 = arith.constant 0 : index
    %33 = vector.load %arg7[%c0_17, %c0_18, %c0_19] : memref<1x8x128xf32, #tpu.memory_space<vmem>>, vector<1x8x128xf32>
    %34 = vector.shape_cast %33 : vector<1x8x128xf32> to vector<8x128xf32>
    %35 = vector.shape_cast %32 : vector<8x128xf32> to vector<1x8x128xf32>
    tpu.vector_store %arg7[%c0_17, %c0_18, %c0_19], %35 {strides = array<i32>} : memref<1x8x128xf32, #tpu.memory_space<vmem>>, vector<1x8x128xf32>,
    return
  }
  func.func @transform_0(%arg0: i32, %arg1: i32) -> (i32, i32, i32) {
    %c0_i32 = arith.constant 0 : i32
    %c0_i32_0 = arith.constant 0 : i32
    return %arg0, %arg1, %c0_i32 : i32, i32, i32
  }
  func.func @transform_1(%arg0: i32, %arg1: i32) -> (i32, i32, i32) {
    %c0_i32 = arith.constant 0 : i32
    %c0_i32_0 = arith.constant 0 : i32
    %c0_i32_1 = arith.constant 0 : i32
    return %arg0, %c0_i32, %c0_i32_0 : i32, i32, i32
  }
  func.func @transform_2(%arg0: i32, %arg1: i32) -> (i32, i32, i32) {
    %c0_i32 = arith.constant 0 : i32
    %c0_i32_0 = arith.constant 0 : i32
    %c0_i32_1 = arith.constant 0 : i32
    return %arg0, %c0_i32, %c0_i32_0 : i32, i32, i32
  }
  func.func @transform_3(%arg0: i32, %arg1: i32) -> (i32, i32) {
    %c0_i32 = arith.constant 0 : i32
    %c0_i32_0 = arith.constant 0 : i32
    %c0_i32_1 = arith.constant 0 : i32
    return %c0_i32, %c0_i32_0 : i32, i32
  }
  func.func @transform_4(%arg0: i32, %arg1: i32) -> (i32, i32) {
    %c0_i32 = arith.constant 0 : i32
    %c0_i32_0 = arith.constant 0 : i32
    %c0_i32_1 = arith.constant 0 : i32
    return %c0_i32, %c0_i32_0 : i32, i32
  }
  func.func @transform_5(%arg0: i32, %arg1: i32) -> (i32, i32, i32) {
    %c0_i32 = arith.constant 0 : i32
    %c0_i32_0 = arith.constant 0 : i32
    return %arg0, %arg1, %c0_i32 : i32, i32, i32
  }
}

</mosaic_0001>

<llo_original>
// kernel: tpu_custom_call.1
$region0: #{tpu_custom_call.1}
  #allocation0 [shape = 'u32[]', space=smem, size = 0x4, offset = 0x4, fixed_abs, tag = 'smem constant byte address 0x4 - core index']
  #allocation1 [shape = 'u32[144,128]{1,0:T(1,128)}', space=vmem, size = 0x12000, scoped, tag = 'internal scratch']
  %s0 = inlined_call_operand.hbm [shape: f32[2,8,32], index: 0, kind: input, shape index: {}]
  %s1 = inlined_call_operand.vmem [shape: f32[2,1,32], index: 1, kind: input, shape index: {}]
  %s2 = inlined_call_operand.vmem [shape: f32[2,1,32], index: 2, kind: input, shape index: {}]
  %s3 = inlined_call_operand.hbm [shape: f32[32,128], index: 3, kind: input, shape index: {}]
  %s4 = inlined_call_operand.vmem [shape: f32[1,128], index: 4, kind: input, shape index: {}]
  %s5 = inlined_call_operand.hbm [shape: f32[2,8,128], index: 5, kind: output, shape index: {}]
  %s6 = sld [smem:[#allocation0]]
  $region61: #{tpu_custom_call.1} parent=0
    _
  %s8 = ssub.s32 1, %s6
  %s9 = scalar_select 0, %s8, %s6
  $region1: #{tpu_custom_call.1} parent=0
    #allocation2 [shape = 'u8[8192]{0}', space=vmem, size = 0x2000, scoped, tag = 'input window, operand 0']
    #allocation3 [shape = 's32[2]{0}', space=sflag, size = 0x8, scoped, tag = 'scoped memory for tpu_custom_call.1']
    #allocation4 [shape = 's32[2]{0}', space=sflag, size = 0x8, scoped, tag = 'scoped memory for tpu_custom_call.1']
    #allocation5 [shape = 'u8[16384]{0}', space=vmem, size = 0x4000, scoped, tag = 'input window, operand 3, single buffered']
    #allocation6 [shape = 's32[1]{0}', space=sflag, size = 0x4, scoped, tag = 'scoped memory for tpu_custom_call.1']
    #allocation7 [shape = 'u8[8192]{0}', space=vmem, size = 0x2000, scoped, tag = 'output window, operand 0']
    %10 = vsyncpa [#allocation3], 0
    %s11 = scalar_lea.sflag [#allocation3], 1
    %12 = vsyncpa %s11, 0
    %13 = vsyncpa [#allocation6], 0
    %14 = vsyncpa [#allocation4], 0
    %s15 = scalar_lea.sflag [#allocation4], 1
    %16 = vsyncpa %s15, 0
    loop: start=0, step=1, limit=4
    $region2: #{tpu_custom_call.1} parent=1 // loop_pre_header
      _
    $region3: #{tpu_custom_call.1} parent=1 // loop_header
      %s18 = sphi 0, %s22
      %p19 = scmp.ge.s32.totalorder %s18, 4
      %s25 = sphi 0, %s37
      %s26 = sphi 0, %s33
      %s27 = sphi 0, %s25
      %s28 = sphi 0, %s26
      %s29 = sphi 0, %s27
      %s30 = sphi 0, %s28
      %s42 = sphi 0, %s44
      %s45 = sphi 0, %s42
      %s46 = sphi 0, %s45
      %s62 = sphi 0, %s46
      %s68 = sphi 0, %s70
      %s71 = sphi 0, %s68
      %s72 = sphi 0, %s71
      %s88 = sphi 0, %s72
      %s94 = sphi 0, %s96
      %s97 = sphi 0, %s94
      %s98 = sphi 0, %s97
      %s114 = sphi 0, %s98
      %s118 = sphi 0, %s118
      %s120 = sphi 0, %s118
      %s121 = sphi 0, %s120
      %s135 = sphi 0, %s121
      %s139 = sphi 0, %s139
      %s141 = sphi 0, %s139
      %s142 = sphi 0, %s141
      %s156 = sphi 0, %s142
      %s164 = sphi 0, %s166
      %s167 = sphi 0, %s164
      %s168 = sphi 0, %s167
      %s184 = sphi 0, %s168
    $region4: #{tpu_custom_call.1} parent=1 // loop_header_branch
      %21 = sbr.rel (%p19) target = $region8
    $region5: #{tpu_custom_call.1} parent=1 // loop_body
      %s23 = ssub.s32 %s18, 1
      %s24 = ssub.s32 %s18, 2
      %s31 = sadd.s32 1, %s26
      %p32 = scmp.ge.s32.totalorder %s31, 1
      %s33 = scalar_select %p32, 0, %s31
      %s34 = sadd.s32 1, %s25
      %s35 = scalar_select %p32, %s34, %s25
      %p36 = scmp.ge.s32.totalorder %s35, 2
      %s37 = scalar_select %p36, 0, %s35
      %s38 = ssub.s32 %s25, %s37
      %s39 = ssub.s32 %s26, %s33
      %s40 = sor.u32 %s38, %s39
      %p41 = scmp.eq.s32.totalorder %s40, 0
      %s43 = sadd.s32 %s42, 1
      %s44 = scalar_select %p41, %s42, %s43
      %p47 = pneg %p41
      %p48 = scmp.eq.s32.totalorder %s18, 1
      %p49 = por %p47, %p48
      %p50 = scmp.ne.s32.totalorder %s42, %s45
      %p51 = scmp.eq.s32.totalorder %s18, 0
      %p52 = por %p50, %p51
      %p53 = scmp.ne.s32.totalorder %s42, %s45
      %p54 = scmp.eq.s32.totalorder %s23, 1
      %p55 = por %p53, %p54
      %p56 = scmp.ne.s32.totalorder %s45, %s46
      %p57 = scmp.eq.s32.totalorder %s23, 0
      %p58 = por %p56, %p57
      %p59 = scmp.ne.s32.totalorder %s45, %s46
      %p60 = scmp.eq.s32.totalorder %s24, 1
      %p61 = por %p59, %p60
      %p63 = scmp.ne.s32.totalorder %s46, %s62
      %p64 = scmp.eq.s32.totalorder %s24, 0
      %p65 = por %p63, %p64
      %s66 = ssub.s32 %s25, %s37
      %p67 = scmp.eq.s32.totalorder %s66, 0
      %s69 = sadd.s32 %s68, 1
      %s70 = scalar_select %p67, %s68, %s69
      %p73 = pneg %p67
      %p74 = scmp.eq.s32.totalorder %s18, 1
      %p75 = por %p73, %p74
      %p76 = scmp.ne.s32.totalorder %s68, %s71
      %p77 = scmp.eq.s32.totalorder %s18, 0
      %p78 = por %p76, %p77
      %p79 = scmp.ne.s32.totalorder %s68, %s71
      %p80 = scmp.eq.s32.totalorder %s23, 1
      %p81 = por %p79, %p80
      %p82 = scmp.ne.s32.totalorder %s71, %s72
      %p83 = scmp.eq.s32.totalorder %s23, 0
      %p84 = por %p82, %p83
      %p85 = scmp.ne.s32.totalorder %s71, %s72
      %p86 = scmp.eq.s32.totalorder %s24, 1
      %p87 = por %p85, %p86
      %p89 = scmp.ne.s32.totalorder %s72, %s88
      %p90 = scmp.eq.s32.totalorder %s24, 0
      %p91 = por %p89, %p90
      %s92 = ssub.s32 %s25, %s37
      %p93 = scmp.eq.s32.totalorder %s92, 0
      %s95 = sadd.s32 %s94, 1
      %s96 = scalar_select %p93, %s94, %s95
      %p99 = pneg %p93
      %p100 = scmp.eq.s32.totalorder %s18, 1
      %p101 = por %p99, %p100
      %p102 = scmp.ne.s32.totalorder %s94, %s97
      %p103 = scmp.eq.s32.totalorder %s18, 0
      %p104 = por %p102, %p103
      %p105 = scmp.ne.s32.totalorder %s94, %s97
      %p106 = scmp.eq.s32.totalorder %s23, 1
      %p107 = por %p105, %p106
      %p108 = scmp.ne.s32.totalorder %s97, %s98
      %p109 = scmp.eq.s32.totalorder %s23, 0
      %p110 = por %p108, %p109
      %p111 = scmp.ne.s32.totalorder %s97, %s98
      %p112 = scmp.eq.s32.totalorder %s24, 1
      %p113 = por %p111, %p112
      %p115 = scmp.ne.s32.totalorder %s98, %s114
      %p116 = scmp.eq.s32.totalorder %s24, 0
      %p117 = por %p115, %p116
      %s119 = sadd.s32 %s118, 1
      %p122 = scmp.eq.s32.totalorder %s18, 1
      %p123 = scmp.ne.s32.totalorder %s118, %s120
      %p124 = scmp.eq.s32.totalorder %s18, 0
      %p125 = por %p123, %p124
      %p126 = scmp.ne.s32.totalorder %s118, %s120
      %p127 = scmp.eq.s32.totalorder %s23, 1
      %p128 = por %p126, %p127
      %p129 = scmp.ne.s32.totalorder %s120, %s121
      %p130 = scmp.eq.s32.totalorder %s23, 0
      %p131 = por %p129, %p130
      %p132 = scmp.ne.s32.totalorder %s120, %s121
      %p133 = scmp.eq.s32.totalorder %s24, 1
      %p134 = por %p132, %p133
      %p136 = scmp.ne.s32.totalorder %s121, %s135
      %p137 = scmp.eq.s32.totalorder %s24, 0
      %p138 = por %p136, %p137
      %s140 = sadd.s32 %s139, 1
      %p143 = scmp.eq.s32.totalorder %s18, 1
      %p144 = scmp.ne.s32.totalorder %s139, %s141
      %p145 = scmp.eq.s32.totalorder %s18, 0
      %p146 = por %p144, %p145
      %p147 = scmp.ne.s32.totalorder %s139, %s141
      %p148 = scmp.eq.s32.totalorder %s23, 1
      %p149 = por %p147, %p148
      %p150 = scmp.ne.s32.totalorder %s141, %s142
      %p151 = scmp.eq.s32.totalorder %s23, 0
      %p152 = por %p150, %p151
      %p153 = scmp.ne.s32.totalorder %s141, %s142
      %p154 = scmp.eq.s32.totalorder %s24, 1
      %p155 = por %p153, %p154
      %p157 = scmp.ne.s32.totalorder %s142, %s156
      %p158 = scmp.eq.s32.totalorder %s24, 0
      %p159 = por %p157, %p158
      %s160 = ssub.s32 %s25, %s37
      %s161 = ssub.s32 %s26, %s33
      %s162 = sor.u32 %s160, %s161
      %p163 = scmp.eq.s32.totalorder %s162, 0
      %s165 = sadd.s32 %s164, 1
      %s166 = scalar_select %p163, %s164, %s165
      %p169 = pneg %p163
      %p170 = scmp.eq.s32.totalorder %s18, 1
      %p171 = por %p169, %p170
      %p172 = scmp.ne.s32.totalorder %s164, %s167
      %p173 = scmp.eq.s32.totalorder %s18, 0
      %p174 = por %p172, %p173
      %p175 = scmp.ne.s32.totalorder %s164, %s167
      %p176 = scmp.eq.s32.totalorder %s23, 1
      %p177 = por %p175, %p176
      %p178 = scmp.ne.s32.totalorder %s167, %s168
      %p179 = scmp.eq.s32.totalorder %s23, 0
      %p180 = por %p178, %p179
      %p181 = scmp.ne.s32.totalorder %s167, %s168
      %p182 = scmp.eq.s32.totalorder %s24, 1
      %p183 = por %p181, %p182
      %p185 = scmp.ne.s32.totalorder %s168, %s184
      %p186 = scmp.eq.s32.totalorder %s24, 0
      %p187 = por %p185, %p186
      %p188 = scmp.le.s32.totalorder 1, %s18
      %p189 = scmp.lt.s32.totalorder %s18, 3
      %p190 = pnand %p188, %p189
      %p191 = pneg %p190
      // Predicated region
      $region9: #{tpu_custom_call.1} parent=5 // pred_check
        _
      $region10: #{tpu_custom_call.1} parent=5 // pred_check_branch
        %193 = sbr.rel (%p190) target = $region12
      $region11: #{tpu_custom_call.1} parent=5 // pred_region
        %s194 = ssub.s32 %s18, 1
        // Predicated region
        $region13: #{tpu_custom_call.1} parent=11 // pred_check
          %p195 = pneg %p131
        $region14: #{tpu_custom_call.1} parent=11 // pred_check_branch
          %197 = sbr.rel (%p195) target = $region16
        $region15: #{tpu_custom_call.1} parent=11 // pred_region
          %s199 = ssub.s32 512, 512
          %200 = vsyncadd [#allocation6], %s199
          %s201 = sshll.u32 [#allocation5], 4
          %s202 = int_to_ptr.vmem [resolvable:$true] %s201
          %207 = dma.hbm_to_vmem [thread:$0]  %s3, 512, %s202, [#allocation6], 128, 128, 8
        $region16: #{tpu_custom_call.1} parent=11 // pred_fallthru
          _
        // Predicated region
        $region17: #{tpu_custom_call.1} parent=11 // pred_check
          %p208 = pneg %p152
        $region18: #{tpu_custom_call.1} parent=11 // pred_check_branch
          %210 = sbr.rel (%p208) target = $region20
        $region19: #{tpu_custom_call.1} parent=11 // pred_region
          _
        $region20: #{tpu_custom_call.1} parent=11 // pred_fallthru
          _
      $region12: #{tpu_custom_call.1} parent=5 // pred_fallthru
        _
      %p211 = scmp.lt.s32.totalorder %s18, 2
      // Predicated region
      $region21: #{tpu_custom_call.1} parent=5 // pred_check
        %p212 = pneg %p211
      $region22: #{tpu_custom_call.1} parent=5 // pred_check_branch
        %214 = sbr.rel (%p212) target = $region24
      $region23: #{tpu_custom_call.1} parent=5 // pred_region
        // Predicated region
        $region25: #{tpu_custom_call.1} parent=23 // pred_check
          %p215 = pneg %p52
        $region26: #{tpu_custom_call.1} parent=23 // pred_check_branch
          %217 = sbr.rel (%p215) target = $region28
        $region27: #{tpu_custom_call.1} parent=23 // pred_region
          %s218 = sand.u32 %s42, 1
          %s219 = scalar_lea.sflag [#allocation3], %s218
          %s220 = sand.u32 %s42, 1
          %s221 = smul.addr %s220, 8
          %s222 = scalar_lea.vmem [#allocation2], %s221
          %s224 = ssub.s32 128, 128
          %225 = vsyncadd %s219, %s224
          %s226 = sadd.s32 %s26, %s25
          %s227 = smul.addr %s226, 128
          %s228 = scalar_lea.hbm %s0, %s227
          %s230 = sshll.u32 %s222, 4
          %s231 = int_to_ptr.vmem [resolvable:$true] %s230
          %233 = dma.hbm_to_vmem [thread:$0]  %s228, 128, %s231, %s219
        $region28: #{tpu_custom_call.1} parent=23 // pred_fallthru
          _
        // Predicated region
        $region29: #{tpu_custom_call.1} parent=23 // pred_check
          %p234 = pneg %p78
        $region30: #{tpu_custom_call.1} parent=23 // pred_check_branch
          %236 = sbr.rel (%p234) target = $region32
        $region31: #{tpu_custom_call.1} parent=23 // pred_region
          %p237 = scmp.lt.s32.totalorder %s25, 1
          %s238 = scalar_select %p237, %s25, 1
          %s239 = scalar_lea.vmem %s1, %s238
        $region32: #{tpu_custom_call.1} parent=23 // pred_fallthru
          _
        // Predicated region
        $region33: #{tpu_custom_call.1} parent=23 // pred_check
          %p240 = pneg %p104
        $region34: #{tpu_custom_call.1} parent=23 // pred_check_branch
          %242 = sbr.rel (%p240) target = $region36
        $region35: #{tpu_custom_call.1} parent=23 // pred_region
          %p243 = scmp.lt.s32.totalorder %s25, 1
          %s244 = scalar_select %p243, %s25, 1
          %s245 = scalar_lea.vmem %s2, %s244
        $region36: #{tpu_custom_call.1} parent=23 // pred_fallthru
          _
      $region24: #{tpu_custom_call.1} parent=5 // pred_fallthru
        _
      %p246 = scmp.le.s32.totalorder 1, %s18
      %p247 = scmp.lt.s32.totalorder %s18, 3
      %p248 = pnand %p246, %p247
      %p249 = pneg %p248
      // Predicated region
      $region37: #{tpu_custom_call.1} parent=5 // pred_check
        _
      $region38: #{tpu_custom_call.1} parent=5 // pred_check_branch
        %251 = sbr.rel (%p248) target = $region40
      $region39: #{tpu_custom_call.1} parent=5 // pred_region
        %s252 = ssub.s32 %s18, 1
        %s253 = sand.u32 %s45, 1
        %s254 = scalar_lea.sflag [#allocation3], %s253
        %s255 = sand.u32 %s45, 1
        %s256 = smul.addr %s255, 8
        %s257 = scalar_lea.vmem [#allocation2], %s256
        // Predicated region
        $region41: #{tpu_custom_call.1} parent=39 // pred_check
          %p258 = pneg %p58
        $region42: #{tpu_custom_call.1} parent=39 // pred_check_branch
          %260 = sbr.rel (%p258) target = $region44
        $region43: #{tpu_custom_call.1} parent=39 // pred_region
          %261 = dma.done %s254, 128
        $region44: #{tpu_custom_call.1} parent=39 // pred_fallthru
          _
        // Predicated region
        $region45: #{tpu_custom_call.1} parent=39 // pred_check
          %p262 = pneg %p131
        $region46: #{tpu_custom_call.1} parent=39 // pred_check_branch
          %264 = sbr.rel (%p262) target = $region48
        $region47: #{tpu_custom_call.1} parent=39 // pred_region
          %265 = dma.done [#allocation6], 512
        $region48: #{tpu_custom_call.1} parent=39 // pred_fallthru
          _
        %s266 = sand.u32 %s45, 1
        %s267 = scalar_lea.sflag [#allocation3], %s266
        %s268 = sand.u32 %s45, 1
        %s269 = smul.addr %s268, 8
        %s270 = scalar_lea.vmem [#allocation2], %s269
        %p271 = pneg %p58
        %p272 = pneg %p55
        %p273 = scmp.lt.s32.totalorder %s27, 1
        %s274 = scalar_select %p273, %s27, 1
        %s275 = scalar_lea.vmem %s1, %s274
        %p276 = pneg %p84
        %p277 = pneg %p81
        %p278 = scmp.lt.s32.totalorder %s27, 1
        %s279 = scalar_select %p278, %s27, 1
        %s280 = scalar_lea.vmem %s2, %s279
        %p281 = pneg %p110
        %p282 = pneg %p107
        %p283 = pneg %p131
        %p284 = pneg %p128
        %p285 = pneg %p152
        %p286 = pneg %p149
        %p287 = pneg %p180
        %p288 = pneg %p177
        %s289 = sand.u32 %s167, 1
        %s290 = scalar_lea.sflag [#allocation4], %s289
        %s291 = sand.u32 %s167, 1
        %s292 = smul.addr %s291, 8
        %s293 = scalar_lea.vmem [#allocation7], %s292
        %p294 = scmp.lt.s32.totalorder %s27, 1
        %s295 = scalar_select %p294, %s27, 1
        %s296 = scalar_lea.vmem %s1, %s295
        %p297 = scmp.lt.s32.totalorder %s27, 1
        %s298 = scalar_select %p297, %s27, 1
        %s299 = scalar_lea.vmem %s2, %s298
        %v300 = vld [vmem:[%s257] sm:$0xff]
        %vm301 = vcmask 261120
        %v302 = vsel %vm301, %v300, 0.0
        %303 = vadd.xlane.f32.xlu0 %v302
        %v304 = vpop.xlane.xlu0 %303
        %v305 = vrcp.pop 32.0
        %v306 = vmul.f32 %v304, %v305
        %v307 = vsub.f32 %v300, %v306
        %v308 = vmul.f32 %v307, %v307
        %v309 = vsel %vm301, %v308, 0.0
        %310 = vadd.xlane.f32.xlu0 %v309
        %v311 = vpop.xlane.xlu0 %310
        %v312 = vmul.f32 %v311, %v305
        %v313 = vadd.f32 %v312, 1e-06
        %v314 = vrsqrt.pop %v313
        %v315 = vmul.f32 %v307, %v314
        %v316 = vld [vmem:[%s299] sm:$0x1]
        %v318 = vlaneseq
        %v319 = vshrl.u32 %v318, 7
        %v320 = vsub.s32 0, %v319
        %v321 = vrot.slane %v316, %v320
        %v323 = vmul.f32 %v315, %v321
        %v324 = vld [vmem:[%s296] sm:$0x1]
        %v326 = vlaneseq
        %v327 = vshrl.u32 %v326, 7
        %v328 = vsub.s32 0, %v327
        %v329 = vrot.slane %v324, %v328
        %v331 = vadd.f32 %v323, %v329
        %v332 = vld [vmem:[#allocation5] sm:$0xff]
        %v333 = vld [vmem:[#allocation5 + $0x8] sm:$0xff]
        %v334 = vld [vmem:[#allocation5 + $0x10] sm:$0xff]
        %v335 = vld [vmem:[#allocation5 + $0x18] sm:$0xff]
        %v336 = vld [vmem:[%s4] sm:$0x1]
        %v338 = vlaneseq
        %v339 = vshrl.u32 %v338, 7
        %v340 = vsub.s32 0, %v339
        %v341 = vrot.slane %v336, %v340
        %v344 = vsel %vm301, %v331, 0
        %346 = vmatprep.subr.mxu0 0.0
        %347 = vmatpush1.msra.mxu0 %v332
        %348 = vmatprep.subr.mxu0 0.0
        %349 = vmatpush1.msra.mxu0 %v333
        %350 = vmatprep.subr.mxu0 0.0
        %351 = vmatpush1.msra.mxu0 %v334
        %352 = vmatprep.subr.mxu0 0.0
        %353 = vmatpush1.msra.mxu0 %v335
        %354 = vmatprep.subr.mxu0 0.0
        %355 = vmatpush1.msra.mxu0 0.0
        %356 = vmatprep.subr.mxu0 0.0
        %357 = vmatpush1.msra.mxu0 0.0
        %358 = vmatprep.subr.mxu0 0.0
        %359 = vmatpush1.msra.mxu0 0.0
        %360 = vmatprep.subr.mxu0 0.0
        %361 = vmatpush1.msra.mxu0 0.0
        %362 = vmatprep.subr.mxu0 0.0
        %363 = vmatpush1.msra.mxu0 0.0
        %364 = vmatprep.subr.mxu0 0.0
        %365 = vmatpush1.msra.mxu0 0.0
        %366 = vmatprep.subr.mxu0 0.0
        %367 = vmatpush1.msra.mxu0 0.0
        %368 = vmatprep.subr.mxu0 0.0
        %369 = vmatpush1.msra.mxu0 0.0
        %370 = vmatprep.subr.mxu0 0.0
        %371 = vmatpush1.msra.mxu0 0.0
        %372 = vmatprep.subr.mxu0 0.0
        %373 = vmatpush1.msra.mxu0 0.0
        %374 = vmatprep.subr.mxu0 0.0
        %375 = vmatpush1.msra.mxu0 0.0
        %376 = vmatprep.subr.mxu0 0.0
        %377 = vmatpush1.msra.mxu0 0.0
        %378 = vmatprep.subr.mxu0 0.0
        %379 = vmatpush1.msra.mxu0 0.0
        %380 = vmatprep.subr.mxu0 0.0
        %381 = vmatpush1.msra.mxu0 0.0
        %382 = vmatprep.subr.mxu0 0.0
        %383 = vmatpush1.msra.mxu0 0.0
        %384 = vmatprep.subr.mxu0 0.0
        %385 = vmatpush1.msra.mxu0 0.0
        %386 = vmatprep.subr.mxu0 0.0
        %387 = vmatpush1.msra.mxu0 0.0
        %388 = vmatprep.subr.mxu0 0.0
        %389 = vmatpush1.msra.mxu0 0.0
        %390 = vmatprep.subr.mxu0 0.0
        %391 = vmatpush1.msra.mxu0 0.0
        %392 = vmatprep.subr.mxu0 0.0
        %393 = vmatpush1.msra.mxu0 0.0
        %394 = vmatprep.subr.mxu0 0.0
        %395 = vmatpush1.msra.mxu0 0.0
        %396 = vmatprep.subr.mxu0 0.0
        %397 = vmatpush1.msra.mxu0 0.0
        %398 = vmatprep.subr.mxu0 0.0
        %399 = vmatpush1.msra.mxu0 0.0
        %400 = vmatprep.subr.mxu0 0.0
        %401 = vmatpush1.msra.mxu0 0.0
        %402 = vmatprep.subr.mxu0 0.0
        %403 = vmatpush1.msra.mxu0 0.0
        %404 = vmatprep.subr.mxu0 0.0
        %405 = vmatpush1.msra.mxu0 0.0
        %406 = vmatprep.subr.mxu0 0.0
        %407 = vmatpush1.msra.mxu0 0.0
        %408 = vmatprep.subr.mxu0 0.0
        %409 = vmatpush1.msra.mxu0 0.0
        %410 = vmatprep.mubr.f32.mxu0 0.0
        %411 = vmatmul.mubr.f32.gmra.mrb[0].mxu0 %v344
        %v412 = vpop.f32.mrb[0].mxu0
        %v413 = vadd.f32 %v341, %v412
        %v414 = vpop.f32.mrb[0].mxu0
        %415 = vdwg.mxu0
        %416 = vst [vmem:[%s293] sm:$0xff] %v413
        %s417 = sand.u32 %s167, 1
        %s418 = scalar_lea.sflag [#allocation4], %s417
        %s419 = sand.u32 %s167, 1
        %s420 = smul.addr %s419, 8
        %s421 = scalar_lea.vmem [#allocation7], %s420
        // Predicated region
        $region49: #{tpu_custom_call.1} parent=39 // pred_check
          %p422 = pneg %p177
        $region50: #{tpu_custom_call.1} parent=39 // pred_check_branch
          %424 = sbr.rel (%p422) target = $region52
        $region51: #{tpu_custom_call.1} parent=39 // pred_region
          %s426 = ssub.s32 128, 128
          %427 = vsyncadd %s418, %s426
          %s428 = sadd.s32 %s28, %s27
          %s429 = smul.addr %s428, 128
          %s430 = scalar_lea.hbm %s5, %s429
          %s432 = sshll.u32 %s421, 4
          %s433 = int_to_ptr.vmem [resolvable:$true] %s432
          %435 = dma.vmem_to_hbm [thread:$0]  %s433, 128, %s430, %s418
        $region52: #{tpu_custom_call.1} parent=39 // pred_fallthru
          _
      $region40: #{tpu_custom_call.1} parent=5 // pred_fallthru
        _
      %p436 = scmp.le.s32.totalorder 2, %s18
      // Predicated region
      $region53: #{tpu_custom_call.1} parent=5 // pred_check
        %p437 = pneg %p436
      $region54: #{tpu_custom_call.1} parent=5 // pred_check_branch
        %439 = sbr.rel (%p437) target = $region56
      $region55: #{tpu_custom_call.1} parent=5 // pred_region
        %s440 = ssub.s32 %s18, 2
        // Predicated region
        $region57: #{tpu_custom_call.1} parent=55 // pred_check
          %p441 = pneg %p183
        $region58: #{tpu_custom_call.1} parent=55 // pred_check_branch
          %443 = sbr.rel (%p441) target = $region60
        $region59: #{tpu_custom_call.1} parent=55 // pred_region
          %s444 = sand.u32 %s168, 1
          %s445 = scalar_lea.sflag [#allocation4], %s444
          %s446 = sand.u32 %s168, 1
          %s447 = smul.addr %s446, 8
          %s448 = scalar_lea.vmem [#allocation7], %s447
          %449 = dma.done %s445, 128
        $region60: #{tpu_custom_call.1} parent=55 // pred_fallthru
          _
      $region56: #{tpu_custom_call.1} parent=5 // pred_fallthru
        _
    $region6: #{tpu_custom_call.1} parent=1 // loop_footer
      %s22 = sadd.s32 1, %s18
    $region7: #{tpu_custom_call.1} parent=1 // loop_footer_branch
      %17 = sbr.rel target = $region3
    $region8: #{tpu_custom_call.1} parent=1 // loop_exit
      _
    %450 = vsyncpa [#allocation3], 1
    %s451 = scalar_lea.sflag [#allocation3], 1
    %452 = vsyncpa %s451, 1
    %453 = vsyncpa [#allocation6], 1
    %454 = vsyncpa [#allocation4], 1
    %s455 = scalar_lea.sflag [#allocation4], 1
    %456 = vsyncpa %s455, 1

</llo_original>
